<compile_context>
chip_gen: v7x
topology: tpu7x:2x2x1
jax: 0.10.0
libtpu: 0.0.40
codegen_flags: <defaults>
</compile_context>

<pallas_src>
import functools

import jax
import jax.numpy as jnp
from jax.experimental import pallas as pl
from jax.experimental.pallas import tpu as pltpu

LANE = 128
SUBLANE = 8
DEFAULT_BATCH_TILE = 512     # 256-512 amortizes the ~0.35us/step grid overhead
_MIN_SPLIT_ROWS = 256        # only split into >=2 grid steps if tiles keep >=128 rows


def _round_up(n, m):
    return ((n + m - 1) // m) * m


def actor_critic_kernel(x_ref, w_ref, b_ref, out_ref, *,
                        d_in_p, n_actor, n_critic, mm_dtype):
    """Fused forward for one [TB, d_in_p] tile of states.

    w_ref rows: [0, d_in_p)        -> w0 (zero-padded to 128 output lanes)
                [d_in_p, +128)     -> w1 (padded)
                [+128, +2*128)     -> fused head: cols [0,na)=actor,
                                      cols [na,na+hc)=critic hidden
                [+2*128, +3*128)   -> wc2 (only present when n_critic > 1)
    b_ref rows (f32): b0, b1, b_head(ba|bc1),
                      n_critic==1: wc2-column row, bc2-at-lane-0 row
                      else:        bc2 row (at lane offset n_actor).
    """
    x = x_ref[...]                                            # [TB, d_in_p] f32

    # F.normalize(x, dim=feature) == x * rsqrt(max(||x||^2, eps^2)), eps=1e-12
    ss = jnp.sum(x * x, axis=-1, keepdims=True)
    xn = x * jax.lax.rsqrt(jnp.maximum(ss, jnp.float32(1e-24)))

    w0 = w_ref[0:d_in_p, :]
    w1 = w_ref[d_in_p:d_in_p + LANE, :]
    wh = w_ref[d_in_p + LANE:d_in_p + 2 * LANE, :]

    # Shared trunk: MXU operands in mm_dtype (bf16 by default), f32 accumulate,
    # all elementwise math in f32.
    y0 = jnp.maximum(
        jnp.dot(xn.astype(mm_dtype), w0, preferred_element_type=jnp.float32)
        + b_ref[0:1, :], 0.0)
    y1 = jnp.maximum(
        jnp.dot(y0.astype(mm_dtype), w1, preferred_element_type=jnp.float32)
        + b_ref[1:2, :], 0.0)

    # Fused head matmul: actor logits in lanes [0,na), critic hidden in
    # lanes [na, na+hc).
    h = (jnp.dot(y1.astype(mm_dtype), wh, preferred_element_type=jnp.float32)
         + b_ref[2:3, :])

    # Actor-lane mask from a (1, LANE) iota; broadcast inside the compares so
    # no full [TB,128] iota / masked copy stays live across the softmax.
    lane = jax.lax.broadcasted_iota(jnp.int32, (1, LANE), 1)
    actor_mask = lane < n_actor

    # log_softmax restricted to the actor lanes.
    a_max = jnp.max(jnp.where(actor_mask, h, -jnp.inf), axis=-1, keepdims=True)
    denom = jnp.sum(jnp.where(actor_mask, jnp.exp(h - a_max), 0.0),
                    axis=-1, keepdims=True)
    logp = h - (jnp.log(denom) + a_max)       # valid on actor lanes only

    # Critic head on relu(h).  (y1.detach() in the reference is a forward no-op.)
    c = jnp.maximum(h, 0.0)
    if n_critic == 1:
        # wc2 is effectively a [hc, 1] column: do the contraction as a VPU
        # multiply by a broadcast row + XLU lane reduction instead of a 4th
        # [128,128] MXU pass (wc block also dropped from the weight DMA).
        wc_row = b_ref[3:4, :]     # wc2[:, 0] at critic-hidden lanes, 0 elsewhere
        bc2_row = b_ref[4:5, :]    # bc2[0] at lane 0, 0 elsewhere
        crit = jnp.tanh(jnp.sum(c * wc_row + bc2_row, axis=-1, keepdims=True))
    else:
        wc = w_ref[d_in_p + 2 * LANE:d_in_p + 3 * LANE, :]
        crit = jnp.tanh(
            jnp.dot(c.astype(mm_dtype), wc, preferred_element_type=jnp.float32)
            + b_ref[3:4, :])

    # Single lane-dense store: actor log-probs in lanes [0,na), critic readable
    # from lane na (n_critic==1 replicates it over all non-actor lanes).
    out_ref[...] = jnp.where(actor_mask, logp, crit)


def pack_params(params, *, dtype=jnp.bfloat16):
    """Pack the 5 (w, b) pairs into one weight buffer (matmul dtype) and one
    f32 bias/side-constant buffer."""
    w0, b0 = params["w0"], params["b0"]
    w1, b1 = params["w1"], params["b1"]
    wa, ba = params["wa"], params["ba"]
    wc1, bc1 = params["wc1"], params["bc1"]
    wc2, bc2 = params["wc2"], params["bc2"]

    d_in, h0 = w0.shape
    h1 = w1.shape[1]
    n_actor, hc, n_critic = wa.shape[1], wc1.shape[1], wc2.shape[1]
    assert h0 <= LANE and h1 <= LANE
    assert n_actor + hc <= LANE and n_actor + n_critic <= LANE

    # Sublane packing of the weight dtype (16 rows/vreg for bf16, 8 for f32):
    # keeps the per-layer row slices of the packed buffer packing-aligned.
    sub = 16 if dtype == jnp.bfloat16 else SUBLANE
    d_in_p = _round_up(d_in, sub)

    w0p = jnp.zeros((d_in_p, LANE), dtype).at[:d_in, :h0].set(w0.astype(dtype))
    w1p = jnp.zeros((LANE, LANE), dtype).at[:h0, :h1].set(w1.astype(dtype))
    whp = (jnp.zeros((LANE, LANE), dtype)
           .at[:h1, :n_actor].set(wa.astype(dtype))
           .at[:h1, n_actor:n_actor + hc].set(wc1.astype(dtype)))
    blocks = [w0p, w1p, whp]
    if n_critic > 1:          # matmul fallback critic head needs the wc block
        wcp = (jnp.zeros((LANE, LANE), dtype)
               .at[n_actor:n_actor + hc,
                   n_actor:n_actor + n_critic].set(wc2.astype(dtype)))
        blocks.append(wcp)
    w_packed = jnp.concatenate(blocks, axis=0)

    def pad_row(v, off=0):
        return jnp.zeros((LANE,), jnp.float32).at[off:off + v.shape[0]].set(
            v.astype(jnp.float32))

    b_head = (jnp.zeros((LANE,), jnp.float32)
              .at[:n_actor].set(ba.astype(jnp.float32))
              .at[n_actor:n_actor + hc].set(bc1.astype(jnp.float32)))
    rows = [pad_row(b0), pad_row(b1), b_head]
    if n_critic == 1:
        rows.append(pad_row(wc2[:, 0], n_actor))   # wc2 column as a lane vector
        rows.append(pad_row(bc2, 0))               # bc2 scalar at lane 0
    else:
        rows.append(pad_row(bc2, n_actor))
    while len(rows) < SUBLANE:
        rows.append(jnp.zeros((LANE,), jnp.float32))
    b_packed = jnp.stack(rows, axis=0)             # [8, 128] f32

    meta = dict(d_in=d_in, d_in_p=d_in_p, n_actor=n_actor, n_critic=n_critic)
    return w_packed, b_packed, meta


def _pick_batch_tile(b, batch_tile):
    """Batch (M) tile: large enough to amortize grid-step overhead, split into
    >=2 'parallel' grid steps for big batches so both v7x TCs get work."""
    bp8 = _round_up(b, SUBLANE)
    if bp8 < _MIN_SPLIT_ROWS:
        return bp8                                    # single grid step
    return min(_round_up(batch_tile, LANE),
               _round_up(pl.cdiv(bp8, 2), LANE))      # multiples of 128


@functools.partial(
    jax.jit,
    static_argnames=("d_in", "d_in_p", "n_actor", "n_critic", "tb",
                     "return_fused"))
def _forward_2d(x, w_packed, b_packed, *, d_in, d_in_p, n_actor, n_critic, tb,
                return_fused):
    b = x.shape[0]
    bp = _round_up(b, tb)
    if b == bp and d_in == d_in_p and x.dtype == jnp.float32:
        xp = x                                        # skip wrapper pad copy
    else:
        xp = jnp.zeros((bp, d_in_p), jnp.float32).at[:b, :d_in].set(
            x.astype(jnp.float32))

    out = pl.pallas_call(
        functools.partial(actor_critic_kernel, d_in_p=d_in_p, n_actor=n_actor,
                          n_critic=n_critic, mm_dtype=w_packed.dtype),
        out_shape=jax.ShapeDtypeStruct((bp, LANE), jnp.float32),
        grid_spec=pltpu.PrefetchScalarGridSpec(
            num_scalar_prefetch=0,
            grid=(bp // tb,),
            in_specs=[
                pl.BlockSpec((tb, d_in_p), lambda i: (i, 0)),
                pl.BlockSpec(w_packed.shape, lambda i: (0, 0)),
                pl.BlockSpec(b_packed.shape, lambda i: (0, 0)),
            ],
            out_specs=pl.BlockSpec((tb, LANE), lambda i: (i, 0)),
        ),
        compiler_params=pltpu.CompilerParams(
            dimension_semantics=("parallel",)),
    )(xp, w_packed, b_packed)

    if return_fused:
        return out                                    # [bp, 128] lane-dense slab
    return out[:b, :n_actor], out[:b, n_actor:n_actor + n_critic]


def actor_critic_forward(x, w_packed, b_packed, meta, *,
                         batch_tile=DEFAULT_BATCH_TILE, return_fused=False):
    """x: [input_dim] (module-exact) or [B, input_dim] (row-wise batched)."""
    squeeze = x.ndim == 1
    x2 = x[None, :] if squeeze else x
    tb = _pick_batch_tile(x2.shape[0], batch_tile)
    res = _forward_2d(
        x2, w_packed, b_packed,
        d_in=meta["d_in"], d_in_p=meta["d_in_p"],
        n_actor=meta["n_actor"], n_critic=meta["n_critic"],
        tb=tb, return_fused=return_fused)
    if return_fused:
        return res
    actor, critic = res
    if squeeze:
        return actor[0], critic[0]
    return actor, critic


def _init_linear(key, fan_in, fan_out):
    # PyTorch nn.Linear default init: U(-1/sqrt(fan_in), 1/sqrt(fan_in))
    kw, kb = jax.random.split(key)
    bound = 1.0 / jnp.sqrt(fan_in)
    w = jax.random.uniform(kw, (fan_in, fan_out), jnp.float32, -bound, bound)
    b = jax.random.uniform(kb, (fan_out,), jnp.float32, -bound, bound)
    return w, b


def _make_params(key, input_dim, h0, h1, hc, na, nc):
    k0, k1, ka, kc1, kc2 = jax.random.split(key, 5)
    w0, b0 = _init_linear(k0, input_dim, h0)
    w1, b1 = _init_linear(k1, h0, h1)
    wa, ba = _init_linear(ka, h1, na)
    wc1, bc1 = _init_linear(kc1, h1, hc)
    wc2, bc2 = _init_linear(kc2, hc, nc)
    return dict(w0=w0, b0=b0, w1=w1, b1=b1, wa=wa, ba=ba,
                wc1=wc1, bc1=bc1, wc2=wc2, bc2=bc2)


def _reference(x, params):
    # pure-JAX reference of the PyTorch forward (1-D state vector)
    xn = x / jnp.maximum(jnp.linalg.norm(x), 1e-12)
    y = jnp.maximum(xn @ params["w0"] + params["b0"], 0.0)
    y = jnp.maximum(y @ params["w1"] + params["b1"], 0.0)
    a = y @ params["wa"] + params["ba"]
    actor = a - (jnp.log(jnp.sum(jnp.exp(a - a.max()))) + a.max())
    c = jnp.maximum(y @ params["wc1"] + params["bc1"], 0.0)
    critic = jnp.tanh(c @ params["wc2"] + params["bc2"])
    return actor, critic


if __name__ == "__main__":
    input_dim, shared_hidden0, shared_hidden1 = 32, 64, 64
    critic_hidden, output_dim_actor, output_dim_critic = 32, 8, 1

    key = jax.random.PRNGKey(0)
    k_params, k_params2, k_x, k_xb, k_xl, k_x2 = jax.random.split(key, 6)

    params = _make_params(k_params, input_dim, shared_hidden0, shared_hidden1,
                          critic_hidden, output_dim_actor, output_dim_critic)

    # f32-packed weights: exact-math check of the fused kernel.
    w_f32, b_f32, meta32 = pack_params(params, dtype=jnp.float32)
    # bf16-packed weights (default fast path): looser tolerances.
    w_bf16, b_bf16, meta16 = pack_params(params)

    # 1) single 1-D state (module-exact), f32 weights -> tight check
    x1 = jax.random.normal(k_x, (input_dim,), jnp.float32)
    a_ref1, c_ref1 = _reference(x1, params)
    actor1, critic1 = actor_critic_forward(x1, w_f32, b_f32, meta32)
    jax.block_until_ready((actor1, critic1))
    assert actor1.shape == (output_dim_actor,)
    assert critic1.shape == (output_dim_critic,)
    assert jnp.allclose(actor1, a_ref1, atol=1e-5, rtol=1e-5)
    assert jnp.allclose(critic1, c_ref1, atol=1e-5, rtol=1e-5)

    # 2) same state on the bf16 fast path
    actor1b, critic1b = actor_critic_forward(x1, w_bf16, b_bf16, meta16)
    jax.block_until_ready((actor1b, critic1b))
    assert jnp.allclose(actor1b, a_ref1, atol=5e-2, rtol=5e-2)
    assert jnp.allclose(critic1b, c_ref1, atol=5e-2, rtol=5e-2)

    # 3) small batch of states (padding inside one tile), bf16 weights
    xb = jax.random.normal(k_xb, (6, input_dim), jnp.float32)
    actor_b, critic_b = actor_critic_forward(xb, w_bf16, b_bf16, meta16)
    jax.block_until_ready((actor_b, critic_b))
    a_refb, c_refb = jax.vmap(lambda r: _reference(r, params))(xb)
    assert actor_b.shape == (6, output_dim_actor)
    assert critic_b.shape == (6, output_dim_critic)
    assert jnp.allclose(actor_b, a_refb, atol=5e-2, rtol=5e-2)
    assert jnp.allclose(critic_b, c_refb, atol=5e-2, rtol=5e-2)

    # 4) larger batch: exercises the >=2-step "parallel" grid split + padding
    xl = jax.random.normal(k_xl, (300, input_dim), jnp.float32)
    actor_l, critic_l = actor_critic_forward(xl, w_bf16, b_bf16, meta16)
    jax.block_until_ready((actor_l, critic_l))
    a_refl, c_refl = jax.vmap(lambda r: _reference(r, params))(xl)
    assert actor_l.shape == (300, output_dim_actor)
    assert jnp.allclose(actor_l, a_refl, atol=5e-2, rtol=5e-2)
    assert jnp.allclose(critic_l, c_refl, atol=5e-2, rtol=5e-2)

    # 5) output_dim_critic > 1 exercises the matmul-fallback critic head (f32)
    params2 = _make_params(k_params2, input_dim, shared_hidden0,
                           shared_hidden1, critic_hidden, output_dim_actor, 2)
    w2, b2, meta2 = pack_params(params2, dtype=jnp.float32)
    x2 = jax.random.normal(k_x2, (3, input_dim), jnp.float32)
    actor2, critic2 = actor_critic_forward(x2, w2, b2, meta2)
    jax.block_until_ready((actor2, critic2))
    a_ref2, c_ref2 = jax.vmap(lambda r: _reference(r, params2))(x2)
    assert critic2.shape == (3, 2)
    assert jnp.allclose(actor2, a_ref2, atol=1e-5, rtol=1e-5)
    assert jnp.allclose(critic2, c_ref2, atol=1e-5, rtol=1e-5)

    print("KERNEL_OK")
</pallas_src>

<mosaic_0001>
module attributes {stable_mosaic.version = 11 : i64} {
  func.func @actor_critic_kernel(%arg0: i32, %arg1: memref<8x32xf32, #tpu.memory_space<vmem>>, %arg2: memref<288x128xf32, #tpu.memory_space<vmem>>, %arg3: memref<8x128xf32, #tpu.memory_space<vmem>>, %arg4: memref<8x128xf32, #tpu.memory_space<vmem>>) attributes {dimension_semantics = [#tpu.dimension_semantics<parallel>], iteration_bounds = array<i64: 1>, scalar_prefetch = 0 : i64, scratch_operands = 0 : i64, tpu.core_type = #tpu.core_type<tc>, window_params = [{transform_indices = @transform_0, window_bounds = array<i64: 8, 32>}, {pipeline_mode = #tpu.pipeline_mode<synchronous>, transform_indices = @transform_1, window_bounds = array<i64: 288, 128>}, {pipeline_mode = #tpu.pipeline_mode<synchronous>, transform_indices = @transform_2, window_bounds = array<i64: 8, 128>}, {transform_indices = @transform_3, window_bounds = array<i64: 8, 128>}]} {
    %c0 = arith.constant 0 : index
    %c0_0 = arith.constant 0 : index
    %0 = vector.load %arg1[%c0, %c0_0] : memref<8x32xf32, #tpu.memory_space<vmem>>, vector<8x32xf32>
    %1 = arith.mulf %0, %0 : vector<8x32xf32>
    %cst = arith.constant dense<0.000000e+00> : vector<8xf32>
    %2 = vector.multi_reduction <add>, %1, %cst [1] : vector<8x32xf32> to vector<8xf32>
    %3 = vector.shape_cast %2 : vector<8xf32> to vector<8x1xf32>
    %cst_1 = arith.constant 1.000000e-24 : f32
    %4 = vector.broadcast %cst_1 : f32 to vector<8x1xf32>
    %5 = arith.maximumf %3, %4 : vector<8x1xf32>
    %6 = math.rsqrt %5 : vector<8x1xf32>
    %7 = vector.broadcast %6 : vector<8x1xf32> to vector<8x32xf32>
    %8 = arith.mulf %0, %7 : vector<8x32xf32>
    %c0_2 = arith.constant 0 : index
    %c0_3 = arith.constant 0 : index
    %9 = vector.load %arg2[%c0_2, %c0_3] : memref<288x128xf32, #tpu.memory_space<vmem>>, vector<32x128xf32>
    %c32 = arith.constant 32 : index
    %c0_4 = arith.constant 0 : index
    %10 = vector.load %arg2[%c32, %c0_4] : memref<288x128xf32, #tpu.memory_space<vmem>>, vector<128x128xf32>
    %c160 = arith.constant 160 : index
    %c0_5 = arith.constant 0 : index
    %11 = vector.load %arg2[%c160, %c0_5] : memref<288x128xf32, #tpu.memory_space<vmem>>, vector<128x128xf32>
    %cst_6 = arith.constant dense<0.000000e+00> : vector<8x128xf32>
    %12 = tpu.matmul %8, %9, %cst_6 {dimension_numbers = #tpu.dot_dimension_numbers<[1], [0], [0], [1], [0, 0, 1, 1], [], []>} : vector<8x32xf32>, vector<32x128xf32>, vector<8x128xf32> -> vector<8x128xf32>
    %c0_7 = arith.constant 0 : index
    %c0_8 = arith.constant 0 : index
    %13 = vector.load %arg3[%c0_7, %c0_8] : memref<8x128xf32, #tpu.memory_space<vmem>>, vector<1x128xf32>
    %14 = vector.broadcast %13 : vector<1x128xf32> to vector<8x128xf32>
    %15 = arith.addf %12, %14 : vector<8x128xf32>
    %cst_9 = arith.constant 0.000000e+00 : f32
    %16 = vector.broadcast %cst_9 : f32 to vector<8x128xf32>
    %17 = arith.maximumf %15, %16 : vector<8x128xf32>
    %cst_10 = arith.constant dense<0.000000e+00> : vector<8x128xf32>
    %18 = tpu.matmul %17, %10, %cst_10 {dimension_numbers = #tpu.dot_dimension_numbers<[1], [0], [0], [1], [0, 0, 1, 1], [], []>} : vector<8x128xf32>, vector<128x128xf32>, vector<8x128xf32> -> vector<8x128xf32>
    %c1 = arith.constant 1 : index
    %c0_11 = arith.constant 0 : index
    %19 = vector.load %arg3[%c1, %c0_11] : memref<8x128xf32, #tpu.memory_space<vmem>>, vector<1x128xf32>
    %20 = vector.broadcast %19 : vector<1x128xf32> to vector<8x128xf32>
    %21 = arith.addf %18, %20 : vector<8x128xf32>
    %cst_12 = arith.constant 0.000000e+00 : f32
    %22 = vector.broadcast %cst_12 : f32 to vector<8x128xf32>
    %23 = arith.maximumf %21, %22 : vector<8x128xf32>
    %cst_13 = arith.constant dense<0.000000e+00> : vector<8x128xf32>
    %24 = tpu.matmul %23, %11, %cst_13 {dimension_numbers = #tpu.dot_dimension_numbers<[1], [0], [0], [1], [0, 0, 1, 1], [], []>} : vector<8x128xf32>, vector<128x128xf32>, vector<8x128xf32> -> vector<8x128xf32>
    %c2 = arith.constant 2 : index
    %c0_14 = arith.constant 0 : index
    %25 = vector.load %arg3[%c2, %c0_14] : memref<8x128xf32, #tpu.memory_space<vmem>>, vector<1x128xf32>
    %26 = vector.broadcast %25 : vector<1x128xf32> to vector<8x128xf32>
    %27 = arith.addf %24, %26 : vector<8x128xf32>
    %28 = tpu.iota {dimensions = array<i32: 1>} : vector<1x128xi32>
    %c8_i32 = arith.constant 8 : i32
    %29 = vector.broadcast %c8_i32 : i32 to vector<1x128xi32>
    %30 = arith.cmpi slt, %28, %29 : vector<1x128xi32>
    %cst_15 = arith.constant 0xFF800000 : f32
    %31 = vector.shape_cast %30 : vector<1x128xi1> to vector<1x128xi1>
    %32 = vector.broadcast %31 : vector<1x128xi1> to vector<8x128xi1>
    %33 = vector.broadcast %cst_15 : f32 to vector<8x128xf32>
    %34 = arith.select %32, %27, %33 : vector<8x128xi1>, vector<8x128xf32>
    %cst_16 = arith.constant dense<0xFF800000> : vector<8xf32>
    %35 = vector.multi_reduction <maximumf>, %34, %cst_16 [1] : vector<8x128xf32> to vector<8xf32>
    %36 = vector.shape_cast %35 : vector<8xf32> to vector<8x1xf32>
    %37 = vector.broadcast %36 : vector<8x1xf32> to vector<8x128xf32>
    %38 = arith.subf %27, %37 : vector<8x128xf32>
    %39 = math.exp %38 : vector<8x128xf32>
    %cst_17 = arith.constant 0.000000e+00 : f32
    %40 = vector.shape_cast %30 : vector<1x128xi1> to vector<1x128xi1>
    %41 = vector.broadcast %40 : vector<1x128xi1> to vector<8x128xi1>
    %42 = vector.broadcast %cst_17 : f32 to vector<8x128xf32>
    %43 = arith.select %41, %39, %42 : vector<8x128xi1>, vector<8x128xf32>
    %cst_18 = arith.constant dense<0.000000e+00> : vector<8xf32>
    %44 = vector.multi_reduction <add>, %43, %cst_18 [1] : vector<8x128xf32> to vector<8xf32>
    %45 = vector.shape_cast %44 : vector<8xf32> to vector<8x1xf32>
    %46 = math.log %45 : vector<8x1xf32>
    %47 = arith.addf %46, %36 : vector<8x1xf32>
    %48 = vector.broadcast %47 : vector<8x1xf32> to vector<8x128xf32>
    %49 = arith.subf %27, %48 : vector<8x128xf32>
    %cst_19 = arith.constant 0.000000e+00 : f32
    %50 = vector.broadcast %cst_19 : f32 to vector<8x128xf32>
    %51 = arith.maximumf %27, %50 : vector<8x128xf32>
    %c3 = arith.constant 3 : index
    %c0_20 = arith.constant 0 : index
    %52 = vector.load %arg3[%c3, %c0_20] : memref<8x128xf32, #tpu.memory_space<vmem>>, vector<1x128xf32>
    %c4 = arith.constant 4 : index
    %c0_21 = arith.constant 0 : index
    %53 = vector.load %arg3[%c4, %c0_21] : memref<8x128xf32, #tpu.memory_space<vmem>>, vector<1x128xf32>
    %54 = vector.broadcast %52 : vector<1x128xf32> to vector<8x128xf32>
    %55 = arith.mulf %51, %54 : vector<8x128xf32>
    %56 = vector.broadcast %53 : vector<1x128xf32> to vector<8x128xf32>
    %57 = arith.addf %55, %56 : vector<8x128xf32>
    %cst_22 = arith.constant dense<0.000000e+00> : vector<8xf32>
    %58 = vector.multi_reduction <add>, %57, %cst_22 [1] : vector<8x128xf32> to vector<8xf32>
    %59 = vector.shape_cast %58 : vector<8xf32> to vector<8x1xf32>
    %60 = math.tanh %59 : vector<8x1xf32>
    %61 = vector.shape_cast %30 : vector<1x128xi1> to vector<1x128xi1>
    %62 = vector.broadcast %61 : vector<1x128xi1> to vector<8x128xi1>
    %63 = vector.shape_cast %60 : vector<8x1xf32> to vector<8x1xf32>
    %64 = vector.broadcast %63 : vector<8x1xf32> to vector<8x128xf32>
    %65 = arith.select %62, %49, %64 : vector<8x128xi1>, vector<8x128xf32>
    %c0_23 = arith.constant 0 : index
    %c0_24 = arith.constant 0 : index
    %66 = vector.load %arg4[%c0_23, %c0_24] : memref<8x128xf32, #tpu.memory_space<vmem>>, vector<8x128xf32>
    tpu.vector_store %arg4[%c0_23, %c0_24], %65 {strides = array<i32>} : memref<8x128xf32, #tpu.memory_space<vmem>>, vector<8x128xf32>,
    return
  }
  func.func @transform_0(%arg0: i32) -> (i32, i32) {
    %c0_i32 = arith.constant 0 : i32
    %c0_i32_0 = arith.constant 0 : i32
    return %arg0, %c0_i32 : i32, i32
  }
  func.func @transform_1(%arg0: i32) -> (i32, i32) {
    %c0_i32 = arith.constant 0 : i32
    %c0_i32_0 = arith.constant 0 : i32
    %c0_i32_1 = arith.constant 0 : i32
    return %c0_i32, %c0_i32_0 : i32, i32
  }
  func.func @transform_2(%arg0: i32) -> (i32, i32) {
    %c0_i32 = arith.constant 0 : i32
    %c0_i32_0 = arith.constant 0 : i32
    %c0_i32_1 = arith.constant 0 : i32
    return %c0_i32, %c0_i32_0 : i32, i32
  }
  func.func @transform_3(%arg0: i32) -> (i32, i32) {
    %c0_i32 = arith.constant 0 : i32
    %c0_i32_0 = arith.constant 0 : i32
    return %arg0, %c0_i32 : i32, i32
  }
}

</mosaic_0001>

<llo_original>
// kernel: _forward_2d.1
$region0: #{_forward_2d.1}
  #allocation0 [shape = 'u32[]', space=smem, size = 0x4, offset = 0x4, fixed_abs, tag = 'smem constant byte address 0x4 - core index']
  #allocation1 [shape = 'u32[144,128]{1,0:T(1,128)}', space=vmem, size = 0x12000, scoped, tag = 'internal scratch']
  %s0 = inlined_call_operand.vmem [shape: f32[8,32], index: 0, kind: input, shape index: {}]
  %s1 = inlined_call_operand.hbm [shape: f32[288,128], index: 1, kind: input, shape index: {}]
  %s2 = inlined_call_operand.vmem [shape: f32[8,128], index: 2, kind: input, shape index: {}]
  %s3 = inlined_call_operand.vmem [shape: f32[8,128], index: 3, kind: output, shape index: {}]
  %s4 = sld [smem:[#allocation0]]
  $region26: #{_forward_2d.1} parent=0
    _
  %s6 = ssub.s32 1, %s4
  %s7 = scalar_select 0, %s6, %s4
  $region1: #{_forward_2d.1} parent=0
    #allocation2 [shape = 'u8[147456]{0}', space=vmem, size = 0x24000, scoped, tag = 'input window, operand 1, single buffered']
    #allocation3 [shape = 's32[1]{0}', space=sflag, size = 0x4, scoped, tag = 'scoped memory for _forward_2d.1']
    %8 = vsyncpa [#allocation3], 0
    // Predicated region
    $region2: #{_forward_2d.1} parent=1 // pred_check
      _
    $region3: #{_forward_2d.1} parent=1 // pred_check_branch
      %10 = sbr.rel (0) target = $region5
    $region4: #{_forward_2d.1} parent=1 // pred_region
      _
    $region5: #{_forward_2d.1} parent=1 // pred_fallthru
      _
    // Predicated region
    $region6: #{_forward_2d.1} parent=1 // pred_check
      _
    $region7: #{_forward_2d.1} parent=1 // pred_check_branch
      %12 = sbr.rel (0) target = $region9
    $region8: #{_forward_2d.1} parent=1 // pred_region
      %s14 = ssub.s32 4608, 4608
      %15 = vsyncadd [#allocation3], %s14
      %s16 = sshll.u32 [#allocation2], 4
      %s17 = int_to_ptr.vmem [resolvable:$true] %s16
      %22 = dma.hbm_to_vmem [thread:$0]  %s1, 4608, %s17, [#allocation3], 128, 128, 8
    $region9: #{_forward_2d.1} parent=1 // pred_fallthru
      _
    // Predicated region
    $region10: #{_forward_2d.1} parent=1 // pred_check
      _
    $region11: #{_forward_2d.1} parent=1 // pred_check_branch
      %24 = sbr.rel (0) target = $region13
    $region12: #{_forward_2d.1} parent=1 // pred_region
      _
    $region13: #{_forward_2d.1} parent=1 // pred_fallthru
      _
    // Predicated region
    $region14: #{_forward_2d.1} parent=1 // pred_check
      _
    $region15: #{_forward_2d.1} parent=1 // pred_check_branch
      %26 = sbr.rel (0) target = $region17
    $region16: #{_forward_2d.1} parent=1 // pred_region
      %27 = dma.done [#allocation3], 4608
    $region17: #{_forward_2d.1} parent=1 // pred_fallthru
      _
    %v28 = vld [vmem:[%s0] sm:$0xff]
    %v29 = vmul.f32 %v28, %v28
    %vm30 = vcmask 261120
    %v31 = vsel %vm30, %v29, 0.0
    %32 = vadd.xlane.f32.xlu0 %v31
    %v33 = vpop.xlane.xlu0 %32
    %v34 = vmax.f32 %v33, 1e-24
    %v35 = vrsqrt.pop %v34
    %v36 = vmul.f32 %v28, %v35
    %v37 = vld [vmem:[#allocation2] sm:$0xff]
    %v38 = vld [vmem:[#allocation2 + $0x8] sm:$0xff]
    %v39 = vld [vmem:[#allocation2 + $0x10] sm:$0xff]
    %v40 = vld [vmem:[#allocation2 + $0x18] sm:$0xff]
    %v41 = vld [vmem:[#allocation2 + $0x20] sm:$0xff]
    %v42 = vld [vmem:[#allocation2 + $0x28] sm:$0xff]
    %v43 = vld [vmem:[#allocation2 + $0x30] sm:$0xff]
    %v44 = vld [vmem:[#allocation2 + $0x38] sm:$0xff]
    %v45 = vld [vmem:[#allocation2 + $0x40] sm:$0xff]
    %v46 = vld [vmem:[#allocation2 + $0x48] sm:$0xff]
    %v47 = vld [vmem:[#allocation2 + $0x50] sm:$0xff]
    %v48 = vld [vmem:[#allocation2 + $0x58] sm:$0xff]
    %v49 = vld [vmem:[#allocation2 + $0x60] sm:$0xff]
    %v50 = vld [vmem:[#allocation2 + $0x68] sm:$0xff]
    %v51 = vld [vmem:[#allocation2 + $0x70] sm:$0xff]
    %v52 = vld [vmem:[#allocation2 + $0x78] sm:$0xff]
    %v53 = vld [vmem:[#allocation2 + $0x80] sm:$0xff]
    %v54 = vld [vmem:[#allocation2 + $0x88] sm:$0xff]
    %v55 = vld [vmem:[#allocation2 + $0x90] sm:$0xff]
    %v56 = vld [vmem:[#allocation2 + $0x98] sm:$0xff]
    %v57 = vld [vmem:[#allocation2 + $0xa0] sm:$0xff]
    %v58 = vld [vmem:[#allocation2 + $0xa8] sm:$0xff]
    %v59 = vld [vmem:[#allocation2 + $0xb0] sm:$0xff]
    %v60 = vld [vmem:[#allocation2 + $0xb8] sm:$0xff]
    %v61 = vld [vmem:[#allocation2 + $0xc0] sm:$0xff]
    %v62 = vld [vmem:[#allocation2 + $0xc8] sm:$0xff]
    %v63 = vld [vmem:[#allocation2 + $0xd0] sm:$0xff]
    %v64 = vld [vmem:[#allocation2 + $0xd8] sm:$0xff]
    %v65 = vld [vmem:[#allocation2 + $0xe0] sm:$0xff]
    %v66 = vld [vmem:[#allocation2 + $0xe8] sm:$0xff]
    %v67 = vld [vmem:[#allocation2 + $0xf0] sm:$0xff]
    %v68 = vld [vmem:[#allocation2 + $0xf8] sm:$0xff]
    %v69 = vld [vmem:[#allocation2 + $0x100] sm:$0xff]
    %v70 = vld [vmem:[#allocation2 + $0x108] sm:$0xff]
    %v71 = vld [vmem:[#allocation2 + $0x110] sm:$0xff]
    %v72 = vld [vmem:[#allocation2 + $0x118] sm:$0xff]
    %v73 = vld [vmem:[%s2] sm:$0x1]
    %v74 = vlaneseq
    %v75 = vshrl.u32 %v74, 7
    %v76 = vsub.s32 0, %v75
    %v77 = vrot.slane %v73, %v76
    %v79 = vsel %vm30, %v36, 0
    %81 = vmatprep.subr.mxu0 0.0
    %82 = vmatpush1.msra.mxu0 %v37
    %83 = vmatprep.subr.mxu0 0.0
    %84 = vmatpush1.msra.mxu0 %v38
    %85 = vmatprep.subr.mxu0 0.0
    %86 = vmatpush1.msra.mxu0 %v39
    %87 = vmatprep.subr.mxu0 0.0
    %88 = vmatpush1.msra.mxu0 %v40
    %89 = vmatprep.subr.mxu0 0.0
    %90 = vmatpush1.msra.mxu0 0.0
    %91 = vmatprep.subr.mxu0 0.0
    %92 = vmatpush1.msra.mxu0 0.0
    %93 = vmatprep.subr.mxu0 0.0
    %94 = vmatpush1.msra.mxu0 0.0
    %95 = vmatprep.subr.mxu0 0.0
    %96 = vmatpush1.msra.mxu0 0.0
    %97 = vmatprep.subr.mxu0 0.0
    %98 = vmatpush1.msra.mxu0 0.0
    %99 = vmatprep.subr.mxu0 0.0
    %100 = vmatpush1.msra.mxu0 0.0
    %101 = vmatprep.subr.mxu0 0.0
    %102 = vmatpush1.msra.mxu0 0.0
    %103 = vmatprep.subr.mxu0 0.0
    %104 = vmatpush1.msra.mxu0 0.0
    %105 = vmatprep.subr.mxu0 0.0
    %106 = vmatpush1.msra.mxu0 0.0
    %107 = vmatprep.subr.mxu0 0.0
    %108 = vmatpush1.msra.mxu0 0.0
    %109 = vmatprep.subr.mxu0 0.0
    %110 = vmatpush1.msra.mxu0 0.0
    %111 = vmatprep.subr.mxu0 0.0
    %112 = vmatpush1.msra.mxu0 0.0
    %113 = vmatprep.subr.mxu0 0.0
    %114 = vmatpush1.msra.mxu0 0.0
    %115 = vmatprep.subr.mxu0 0.0
    %116 = vmatpush1.msra.mxu0 0.0
    %117 = vmatprep.subr.mxu0 0.0
    %118 = vmatpush1.msra.mxu0 0.0
    %119 = vmatprep.subr.mxu0 0.0
    %120 = vmatpush1.msra.mxu0 0.0
    %121 = vmatprep.subr.mxu0 0.0
    %122 = vmatpush1.msra.mxu0 0.0
    %123 = vmatprep.subr.mxu0 0.0
    %124 = vmatpush1.msra.mxu0 0.0
    %125 = vmatprep.subr.mxu0 0.0
    %126 = vmatpush1.msra.mxu0 0.0
    %127 = vmatprep.subr.mxu0 0.0
    %128 = vmatpush1.msra.mxu0 0.0
    %129 = vmatprep.subr.mxu0 0.0
    %130 = vmatpush1.msra.mxu0 0.0
    %131 = vmatprep.subr.mxu0 0.0
    %132 = vmatpush1.msra.mxu0 0.0
    %133 = vmatprep.subr.mxu0 0.0
    %134 = vmatpush1.msra.mxu0 0.0
    %135 = vmatprep.subr.mxu0 0.0
    %136 = vmatpush1.msra.mxu0 0.0
    %137 = vmatprep.subr.mxu0 0.0
    %138 = vmatpush1.msra.mxu0 0.0
    %139 = vmatprep.subr.mxu0 0.0
    %140 = vmatpush1.msra.mxu0 0.0
    %141 = vmatprep.subr.mxu0 0.0
    %142 = vmatpush1.msra.mxu0 0.0
    %143 = vmatprep.subr.mxu0 0.0
    %144 = vmatpush1.msra.mxu0 0.0
    %145 = vmatprep.mubr.f32.mxu0 0.0
    %146 = vmatmul.mubr.f32.gmra.mrb[0].mxu0 %v79
    %v147 = vpop.f32.mrb[0].mxu0
    %v148 = vadd.f32 %v77, %v147
    %v149 = vpop.f32.mrb[0].mxu0
    %150 = vdwg.mxu0
    %v151 = vmax.f32 %v148, 0.0
    %v152 = vld [vmem:[%s2 + $0x1] sm:$0x1]
    %v153 = vlaneseq
    %v154 = vshrl.u32 %v153, 7
    %v155 = vsub.s32 0, %v154
    %v156 = vrot.slane %v152, %v155
    %157 = vmatprep.subr.mxu0 0.0
    %158 = vmatpush1.msra.mxu0 %v41
    %159 = vmatprep.subr.mxu0 0.0
    %160 = vmatpush1.msra.mxu0 %v42
    %161 = vmatprep.subr.mxu0 0.0
    %162 = vmatpush1.msra.mxu0 %v43
    %163 = vmatprep.subr.mxu0 0.0
    %164 = vmatpush1.msra.mxu0 %v44
    %165 = vmatprep.subr.mxu0 0.0
    %166 = vmatpush1.msra.mxu0 %v45
    %167 = vmatprep.subr.mxu0 0.0
    %168 = vmatpush1.msra.mxu0 %v46
    %169 = vmatprep.subr.mxu0 0.0
    %170 = vmatpush1.msra.mxu0 %v47
    %171 = vmatprep.subr.mxu0 0.0
    %172 = vmatpush1.msra.mxu0 %v48
    %173 = vmatprep.subr.mxu0 0.0
    %174 = vmatpush1.msra.mxu0 %v49
    %175 = vmatprep.subr.mxu0 0.0
    %176 = vmatpush1.msra.mxu0 %v50
    %177 = vmatprep.subr.mxu0 0.0
    %178 = vmatpush1.msra.mxu0 %v51
    %179 = vmatprep.subr.mxu0 0.0
    %180 = vmatpush1.msra.mxu0 %v52
    %181 = vmatprep.subr.mxu0 0.0
    %182 = vmatpush1.msra.mxu0 %v53
    %183 = vmatprep.subr.mxu0 0.0
    %184 = vmatpush1.msra.mxu0 %v54
    %185 = vmatprep.subr.mxu0 0.0
    %186 = vmatpush1.msra.mxu0 %v55
    %187 = vmatprep.subr.mxu0 0.0
    %188 = vmatpush1.msra.mxu0 %v56
    %189 = vmatprep.subr.mxu0 0.0
    %190 = vmatpush1.msra.mxu0 0.0
    %191 = vmatprep.subr.mxu0 0.0
    %192 = vmatpush1.msra.mxu0 0.0
    %193 = vmatprep.subr.mxu0 0.0
    %194 = vmatpush1.msra.mxu0 0.0
    %195 = vmatprep.subr.mxu0 0.0
    %196 = vmatpush1.msra.mxu0 0.0
    %197 = vmatprep.subr.mxu0 0.0
    %198 = vmatpush1.msra.mxu0 0.0
    %199 = vmatprep.subr.mxu0 0.0
    %200 = vmatpush1.msra.mxu0 0.0
    %201 = vmatprep.subr.mxu0 0.0
    %202 = vmatpush1.msra.mxu0 0.0
    %203 = vmatprep.subr.mxu0 0.0
    %204 = vmatpush1.msra.mxu0 0.0
    %205 = vmatprep.subr.mxu0 0.0
    %206 = vmatpush1.msra.mxu0 0.0
    %207 = vmatprep.subr.mxu0 0.0
    %208 = vmatpush1.msra.mxu0 0.0
    %209 = vmatprep.subr.mxu0 0.0
    %210 = vmatpush1.msra.mxu0 0.0
    %211 = vmatprep.subr.mxu0 0.0
    %212 = vmatpush1.msra.mxu0 0.0
    %213 = vmatprep.subr.mxu0 0.0
    %214 = vmatpush1.msra.mxu0 0.0
    %215 = vmatprep.subr.mxu0 0.0
    %216 = vmatpush1.msra.mxu0 0.0
    %217 = vmatprep.subr.mxu0 0.0
    %218 = vmatpush1.msra.mxu0 0.0
    %219 = vmatprep.subr.mxu0 0.0
    %220 = vmatpush1.msra.mxu0 0.0
    %221 = vmatprep.mubr.f32.mxu0 0.0
    %222 = vmatmul.mubr.f32.gmra.mrb[0].mxu0 %v151
    %v223 = vpop.f32.mrb[0].mxu0
    %v224 = vadd.f32 %v156, %v223
    %v225 = vpop.f32.mrb[0].mxu0
    %226 = vdwg.mxu0
    %v227 = vmax.f32 %v224, 0.0
    %v228 = vld [vmem:[%s2 + $0x2] sm:$0x1]
    %v229 = vlaneseq
    %v230 = vshrl.u32 %v229, 7
    %v231 = vsub.s32 0, %v230
    %v232 = vrot.slane %v228, %v231
    %233 = vmatprep.subr.mxu0 0.0
    %234 = vmatpush1.msra.mxu0 %v57
    %235 = vmatprep.subr.mxu0 0.0
    %236 = vmatpush1.msra.mxu0 %v58
    %237 = vmatprep.subr.mxu0 0.0
    %238 = vmatpush1.msra.mxu0 %v59
    %239 = vmatprep.subr.mxu0 0.0
    %240 = vmatpush1.msra.mxu0 %v60
    %241 = vmatprep.subr.mxu0 0.0
    %242 = vmatpush1.msra.mxu0 %v61
    %243 = vmatprep.subr.mxu0 0.0
    %244 = vmatpush1.msra.mxu0 %v62
    %245 = vmatprep.subr.mxu0 0.0
    %246 = vmatpush1.msra.mxu0 %v63
    %247 = vmatprep.subr.mxu0 0.0
    %248 = vmatpush1.msra.mxu0 %v64
    %249 = vmatprep.subr.mxu0 0.0
    %250 = vmatpush1.msra.mxu0 %v65
    %251 = vmatprep.subr.mxu0 0.0
    %252 = vmatpush1.msra.mxu0 %v66
    %253 = vmatprep.subr.mxu0 0.0
    %254 = vmatpush1.msra.mxu0 %v67
    %255 = vmatprep.subr.mxu0 0.0
    %256 = vmatpush1.msra.mxu0 %v68
    %257 = vmatprep.subr.mxu0 0.0
    %258 = vmatpush1.msra.mxu0 %v69
    %259 = vmatprep.subr.mxu0 0.0
    %260 = vmatpush1.msra.mxu0 %v70
    %261 = vmatprep.subr.mxu0 0.0
    %262 = vmatpush1.msra.mxu0 %v71
    %263 = vmatprep.subr.mxu0 0.0
    %264 = vmatpush1.msra.mxu0 %v72
    %265 = vmatprep.subr.mxu0 0.0
    %266 = vmatpush1.msra.mxu0 0.0
    %267 = vmatprep.subr.mxu0 0.0
    %268 = vmatpush1.msra.mxu0 0.0
    %269 = vmatprep.subr.mxu0 0.0
    %270 = vmatpush1.msra.mxu0 0.0
    %271 = vmatprep.subr.mxu0 0.0
    %272 = vmatpush1.msra.mxu0 0.0
    %273 = vmatprep.subr.mxu0 0.0
    %274 = vmatpush1.msra.mxu0 0.0
    %275 = vmatprep.subr.mxu0 0.0
    %276 = vmatpush1.msra.mxu0 0.0
    %277 = vmatprep.subr.mxu0 0.0
    %278 = vmatpush1.msra.mxu0 0.0
    %279 = vmatprep.subr.mxu0 0.0
    %280 = vmatpush1.msra.mxu0 0.0
    %281 = vmatprep.subr.mxu0 0.0
    %282 = vmatpush1.msra.mxu0 0.0
    %283 = vmatprep.subr.mxu0 0.0
    %284 = vmatpush1.msra.mxu0 0.0
    %285 = vmatprep.subr.mxu0 0.0
    %286 = vmatpush1.msra.mxu0 0.0
    %287 = vmatprep.subr.mxu0 0.0
    %288 = vmatpush1.msra.mxu0 0.0
    %289 = vmatprep.subr.mxu0 0.0
    %290 = vmatpush1.msra.mxu0 0.0
    %291 = vmatprep.subr.mxu0 0.0
    %292 = vmatpush1.msra.mxu0 0.0
    %293 = vmatprep.subr.mxu0 0.0
    %294 = vmatpush1.msra.mxu0 0.0
    %295 = vmatprep.subr.mxu0 0.0
    %296 = vmatpush1.msra.mxu0 0.0
    %297 = vmatprep.mubr.f32.mxu0 0.0
    %298 = vmatmul.mubr.f32.gmra.mrb[0].mxu0 %v227
    %v299 = vpop.f32.mrb[0].mxu0
    %v300 = vadd.f32 %v232, %v299
    %v301 = vpop.f32.mrb[0].mxu0
    %302 = vdwg.mxu0
    %v303 = vlaneseq
    %v304 = vand.u32 %v303, 127
    %vm305 = vcmp.lt.s32.totalorder %v304, 8
    %v306 = vsel %vm305, 1, 0
    %vm307 = vcmp.eq.s32.totalorder %v306, 1
    %v308 = vsel %vm307, %v300, -inf
    %309 = vmax.xlane.f32.xlu0 %v308
    %v310 = vpop.xlane.xlu0 %309
    %v311 = vsub.f32 %v300, %v310
    %v312 = vmul.f32 %v311, 1.442695
    %v313 = vpow.pop %v312
    %v314 = vsel %vm307, %v313, 0.0
    %315 = vadd.xlane.f32.xlu0 %v314
    %v316 = vpop.xlane.xlu0 %315
    %v317 = vlog2.pop %v316
    %v318 = vmul.f32 %v317, 0.6931472
    %v319 = vadd.f32 %v318, %v310
    %v320 = vsub.f32 %v300, %v319
    %v321 = vmax.f32 %v300, 0.0
    %v322 = vld [vmem:[%s2 + $0x3] sm:$0x1]
    %v323 = vld [vmem:[%s2 + $0x4] sm:$0x1]
    %v324 = vlaneseq
    %v325 = vshrl.u32 %v324, 7
    %v326 = vsub.s32 0, %v325
    %v327 = vrot.slane %v322, %v326
    %v328 = vmul.f32 %v321, %v327
    %v329 = vlaneseq
    %v330 = vshrl.u32 %v329, 7
    %v331 = vsub.s32 0, %v330
    %v332 = vrot.slane %v323, %v331
    %v333 = vadd.f32 %v328, %v332
    %334 = vadd.xlane.f32.xlu0 %v333
    %v335 = vpop.xlane.xlu0 %334
    %v336 = vtanh.pop %v335
    %v337 = vsel %vm307, %v320, %v336
    %338 = vst [vmem:[%s3] sm:$0xff] %v337
    // Predicated region
    $region18: #{_forward_2d.1} parent=1 // pred_check
      _
    $region19: #{_forward_2d.1} parent=1 // pred_check_branch
      %340 = sbr.rel (0) target = $region21
    $region20: #{_forward_2d.1} parent=1 // pred_region
      _
    $region21: #{_forward_2d.1} parent=1 // pred_fallthru
      _
    // Predicated region
    $region22: #{_forward_2d.1} parent=1 // pred_check
      _
    $region23: #{_forward_2d.1} parent=1 // pred_check_branch
      %342 = sbr.rel (0) target = $region25
    $region24: #{_forward_2d.1} parent=1 // pred_region
      _
    $region25: #{_forward_2d.1} parent=1 // pred_fallthru
      _
    %343 = vsyncpa [#allocation3], 1

</llo_original>
